<compile_context>
chip_gen: v7x
topology: tpu7x:2x2x1
jax: 0.10.0
libtpu: 0.0.40
codegen_flags: <defaults>
</compile_context>

<pallas_src>
import jax
import jax.numpy as jnp
from jax import lax
from jax.experimental import pallas as pl
from jax.experimental.pallas import tpu as pltpu


def _round_up(n, m):
    return (n + m - 1) // m * m


def _cdiv(a, b):
    return (a + b - 1) // b


def _vmem_limit_bytes():
    """Generation-aware VMEM budget (v5e/v6e: 128 MiB physical, v7x: 64 MiB)."""
    try:
        cap = int(pltpu.get_tpu_info().vmem_capacity_bytes)
    except Exception:
        cap = 64 * 1024 * 1024          # conservative fallback (v7x-sized)
    return min(cap * 3 // 4, 96 * 1024 * 1024)


# ---------------------------------------------------------------------------
# Kernels
# ---------------------------------------------------------------------------

def tower_kernel(x_ref, w1_ref, b1_ref, w2_ref, b2_ref, out_ref):
    """out = relu(x @ W1 + b1) @ W2 + b2  (bf16 MXU inputs, f32 accumulation)."""
    h = jnp.maximum(
        jnp.dot(x_ref[...], w1_ref[...], preferred_element_type=jnp.float32)
        + b1_ref[...], 0.0)
    e = jnp.dot(h.astype(w2_ref.dtype), w2_ref[...],
                preferred_element_type=jnp.float32) + b2_ref[...]
    out_ref[...] = e.astype(out_ref.dtype)


def item_scores_kernel(ue_ref, ix_ref, iw1_ref, ib1_ref, iw2_ref, ib2_ref,
                       out_ref):
    """Item tower for one item tile + similarity vs. resident user embeddings."""
    ih = jnp.maximum(
        jnp.dot(ix_ref[...], iw1_ref[...], preferred_element_type=jnp.float32)
        + ib1_ref[...], 0.0)
    ie = jnp.dot(ih.astype(iw2_ref.dtype), iw2_ref[...],
                 preferred_element_type=jnp.float32) + ib2_ref[...]
    # scores = ue @ ie.T expressed as a transposed-RHS contraction, so no
    # explicit transpose / extra VMEM copy of the [ti, E] item-embedding tile.
    out_ref[...] = lax.dot_general(
        ue_ref[...], ie.astype(ue_ref.dtype),
        dimension_numbers=(((1,), (1,)), ((), ())),
        preferred_element_type=jnp.float32,
    ).astype(out_ref.dtype)


# ---------------------------------------------------------------------------
# Wrappers
# ---------------------------------------------------------------------------

def _user_embeddings(ux, uw1, ub1, uw2, ub2, vmem_limit):
    """User tower computed once as a single-VMEM-block kernel (no pipeline)."""
    # TODO(synk): tile over user rows for very large user batches; a single
    # VMEM block is fine for typical serving batch sizes.
    U_pad = ux.shape[0]
    E = uw2.shape[1]
    vmem = pl.BlockSpec(memory_space=pltpu.MemorySpace.VMEM)
    return pl.pallas_call(
        tower_kernel,
        out_shape=jax.ShapeDtypeStruct((U_pad, E), jnp.bfloat16),
        in_specs=[vmem] * 5,
        out_specs=vmem,
        compiler_params=pltpu.CompilerParams(vmem_limit_bytes=vmem_limit),
    )(ux, uw1, ub1, uw2, ub2)


def recommender_system(user_x, item_x, user_params, item_params, *,
                       item_tile=None):
    """user_x: [U, F], item_x: [I, F] -> scores [U, I] (float32)."""
    uw1, ub1, uw2, ub2 = user_params
    iw1, ib1, iw2, ib2 = item_params
    U, _ = user_x.shape
    I, Fi = item_x.shape
    H = iw1.shape[1]
    E = iw2.shape[1]

    vmem_limit = _vmem_limit_bytes()

    # bf16 activations/weights, f32 biases; accumulation stays f32 in-kernel.
    bf = jnp.bfloat16
    U_pad = _round_up(U, 8)
    ux = jnp.pad(user_x, ((0, U_pad - U), (0, 0))).astype(bf)
    ix = item_x.astype(bf)                       # NO padded HBM copy of item_x
    uw1b, uw2b = uw1.astype(bf), uw2.astype(bf)
    iw1b, iw2b = iw1.astype(bf), iw2.astype(bf)
    ub1f, ub2f = ub1.astype(jnp.float32), ub2.astype(jnp.float32)
    ib1f, ib2f = ib1.astype(jnp.float32), ib2.astype(jnp.float32)

    # ---- user tower: computed once, passed as a resident [U_pad, E] input ----
    ue = _user_embeddings(ux, uw1b, ub1f, uw2b, ub2f, vmem_limit)

    # ---- item tile: largest 128-multiple whose working set fits the budget ----
    if item_tile is None:
        budget = int(vmem_limit * 0.4)           # headroom for residents etc.
        per_row = (2 * Fi * 2                    # streamed bf16 tile, 2x buffered
                   + (H + E) * 4 + E * 2         # f32 temps (+ bf16 copy of ie)
                   + 2 * U_pad * 4)              # f32 output block, 2x buffered
        item_tile = max(128, budget // per_row)
    ti = max(128, item_tile // 128 * 128)
    ti = min(ti, _round_up(I, 128))
    # Keep >=2 grid steps for catalogs spanning >=2 lane tiles so the
    # "parallel" axis can feed both TensorCores on v7x (negligible elsewhere).
    if _round_up(I, 128) >= 256:
        ti = min(ti, _round_up(_cdiv(I, 2), 128))
    n_tiles = _cdiv(I, ti)                       # ragged last tile handled by Pallas
    I_out = n_tiles * ti                         # lane-dense output; sliced below

    flops = 2 * (I_out * Fi * H + I_out * H * E + U_pad * E * I_out)
    bytes_accessed = (2 * (ue.size + ix.size + iw1b.size + iw2b.size)
                      + 4 * (ib1f.size + ib2f.size + U_pad * I_out))
    cost = pl.CostEstimate(flops=int(flops), transcendentals=0,
                           bytes_accessed=int(bytes_accessed))

    # Resident operands: constant block index -> stay in VMEM, no re-DMA.
    def resident(shape):
        nd = len(shape)
        return pl.BlockSpec(shape, lambda j, _nd=nd: (0,) * _nd)

    scores = pl.pallas_call(
        item_scores_kernel,
        out_shape=jax.ShapeDtypeStruct((U_pad, I_out), jnp.float32),
        grid=(n_tiles,),
        in_specs=[
            resident(ue.shape),
            pl.BlockSpec((ti, Fi), lambda j: (j, 0)),   # item tile streams
            resident(iw1b.shape), resident(ib1f.shape),
            resident(iw2b.shape), resident(ib2f.shape),
        ],
        out_specs=pl.BlockSpec((U_pad, ti), lambda j: (0, j)),
        cost_estimate=cost,
        compiler_params=pltpu.CompilerParams(
            dimension_semantics=("parallel",),          # megacore on v7x
            vmem_limit_bytes=vmem_limit),
    )(ue, ix, iw1b, ib1f, iw2b, ib2f)

    return scores[:U, :I]


# ---------------------------------------------------------------------------
# Reference / test
# ---------------------------------------------------------------------------

def init_tower(key, in_dim, hidden_dim, embed_dim):
    """Deterministic tower params; weights stored as [in, out] (x @ W == x @ weight.T)."""
    k1, k2, k3, k4 = jax.random.split(key, 4)
    w1 = jax.random.normal(k1, (in_dim, hidden_dim), jnp.float32) * 0.05
    b1 = jax.random.normal(k2, (1, hidden_dim), jnp.float32) * 0.01
    w2 = jax.random.normal(k3, (hidden_dim, embed_dim), jnp.float32) * 0.05
    b2 = jax.random.normal(k4, (1, embed_dim), jnp.float32) * 0.01
    return (w1, b1, w2, b2)


def _tower_ref(x, params, dtype):
    w1, b1, w2, b2 = params
    h = jnp.maximum(
        jnp.dot(x.astype(dtype), w1.astype(dtype),
                preferred_element_type=jnp.float32) + b1, 0.0)
    return jnp.dot(h.astype(dtype), w2.astype(dtype),
                   preferred_element_type=jnp.float32) + b2


def reference(user_x, item_x, user_params, item_params, dtype=jnp.bfloat16):
    ue = _tower_ref(user_x, user_params, dtype)
    ie = _tower_ref(item_x, item_params, dtype)
    return jnp.dot(ue.astype(dtype), ie.astype(dtype).T,
                   preferred_element_type=jnp.float32)


if __name__ == "__main__":
    key = jax.random.PRNGKey(0)
    k_ux, k_ix, k_up, k_ip, k_ix2 = jax.random.split(key, 5)

    # Small shapes: 8 users, 16 items, 32 input features, hidden 64, embed 32.
    U, I, F, H, E = 8, 16, 32, 64, 32
    user_x = jax.random.normal(k_ux, (U, F), jnp.float32)
    item_x = jax.random.normal(k_ix, (I, F), jnp.float32)
    user_params = init_tower(k_up, F, H, E)
    item_params = init_tower(k_ip, F, H, E)

    # Case 1: catalog fits a single 128-wide item tile (grid of 1).
    scores = jax.block_until_ready(
        recommender_system(user_x, item_x, user_params, item_params))
    ref_bf16 = reference(user_x, item_x, user_params, item_params)
    ref_f32 = reference(user_x, item_x, user_params, item_params,
                        dtype=jnp.float32)
    assert scores.shape == (U, I)
    assert jnp.allclose(scores, ref_bf16, atol=1e-2, rtol=1e-2), \
        "mismatch vs bf16 reference (single tile)"
    assert jnp.allclose(scores, ref_f32, atol=5e-2, rtol=5e-2), \
        "mismatch vs f32 reference (single tile)"

    # Case 2: larger catalog -> multi-tile parallel grid with a ragged tail.
    I2 = 300
    item_x2 = jax.random.normal(k_ix2, (I2, F), jnp.float32)
    scores2 = jax.block_until_ready(
        recommender_system(user_x, item_x2, user_params, item_params))
    ref2_bf16 = reference(user_x, item_x2, user_params, item_params)
    assert scores2.shape == (U, I2)
    assert jnp.allclose(scores2, ref2_bf16, atol=1e-2, rtol=1e-2), \
        "mismatch vs bf16 reference (tiled)"

    print("KERNEL_OK")
</pallas_src>

<mosaic_0001>
module attributes {stable_mosaic.version = 11 : i64} {
  func.func @tower_kernel(%arg0: memref<8x32xbf16, #tpu.memory_space<vmem>>, %arg1: memref<32x64xbf16, #tpu.memory_space<vmem>>, %arg2: memref<1x64xf32, #tpu.memory_space<vmem>>, %arg3: memref<64x32xbf16, #tpu.memory_space<vmem>>, %arg4: memref<1x32xf32, #tpu.memory_space<vmem>>, %arg5: memref<8x32xbf16, #tpu.memory_space<vmem>>) attributes {dimension_semantics = [], scalar_prefetch = 0 : i64, scratch_operands = 0 : i64, tpu.core_type = #tpu.core_type<tc>} {
    %c0 = arith.constant 0 : index
    %c0_0 = arith.constant 0 : index
    %0 = vector.load %arg0[%c0, %c0_0] : memref<8x32xbf16, #tpu.memory_space<vmem>>, vector<8x32xbf16>
    %c0_1 = arith.constant 0 : index
    %c0_2 = arith.constant 0 : index
    %1 = vector.load %arg1[%c0_1, %c0_2] : memref<32x64xbf16, #tpu.memory_space<vmem>>, vector<32x64xbf16>
    %cst = arith.constant dense<0.000000e+00> : vector<8x64xf32>
    %2 = tpu.matmul %0, %1, %cst {dimension_numbers = #tpu.dot_dimension_numbers<[1], [0], [0], [1], [0, 0, 1, 1], [], []>} : vector<8x32xbf16>, vector<32x64xbf16>, vector<8x64xf32> -> vector<8x64xf32>
    %c0_3 = arith.constant 0 : index
    %c0_4 = arith.constant 0 : index
    %3 = vector.load %arg2[%c0_3, %c0_4] : memref<1x64xf32, #tpu.memory_space<vmem>>, vector<1x64xf32>
    %4 = vector.broadcast %3 : vector<1x64xf32> to vector<8x64xf32>
    %5 = arith.addf %2, %4 : vector<8x64xf32>
    %cst_5 = arith.constant 0.000000e+00 : f32
    %6 = vector.broadcast %cst_5 : f32 to vector<8x64xf32>
    %7 = arith.maximumf %5, %6 : vector<8x64xf32>
    %8 = arith.truncf %7 : vector<8x64xf32> to vector<8x64xbf16>
    %c0_6 = arith.constant 0 : index
    %c0_7 = arith.constant 0 : index
    %9 = vector.load %arg3[%c0_6, %c0_7] : memref<64x32xbf16, #tpu.memory_space<vmem>>, vector<64x32xbf16>
    %cst_8 = arith.constant dense<0.000000e+00> : vector<8x32xf32>
    %10 = tpu.matmul %8, %9, %cst_8 {dimension_numbers = #tpu.dot_dimension_numbers<[1], [0], [0], [1], [0, 0, 1, 1], [], []>} : vector<8x64xbf16>, vector<64x32xbf16>, vector<8x32xf32> -> vector<8x32xf32>
    %c0_9 = arith.constant 0 : index
    %c0_10 = arith.constant 0 : index
    %11 = vector.load %arg4[%c0_9, %c0_10] : memref<1x32xf32, #tpu.memory_space<vmem>>, vector<1x32xf32>
    %12 = vector.broadcast %11 : vector<1x32xf32> to vector<8x32xf32>
    %13 = arith.addf %10, %12 : vector<8x32xf32>
    %14 = arith.truncf %13 : vector<8x32xf32> to vector<8x32xbf16>
    %c0_11 = arith.constant 0 : index
    %c0_12 = arith.constant 0 : index
    %15 = vector.load %arg5[%c0_11, %c0_12] : memref<8x32xbf16, #tpu.memory_space<vmem>>, vector<8x32xbf16>
    tpu.vector_store %arg5[%c0_11, %c0_12], %14 {strides = array<i32>} : memref<8x32xbf16, #tpu.memory_space<vmem>>, vector<8x32xbf16>,
    return
  }
}

</mosaic_0001>

<llo_original>
// kernel: tpu_custom_call.1
$region0: #{tpu_custom_call.1}
  #allocation0 [shape = 'u32[]', space=smem, size = 0x4, offset = 0x4, fixed_abs, tag = 'smem constant byte address 0x4 - core index']
  #allocation1 [shape = 'u32[144,128]{1,0:T(1,128)}', space=vmem, size = 0x12000, scoped, tag = 'internal scratch']
  %s0 = inlined_call_operand.vmem [shape: bf16[8,32], index: 0, kind: input, shape index: {}]
  %s1 = inlined_call_operand.vmem [shape: bf16[32,64], index: 1, kind: input, shape index: {}]
  %s2 = inlined_call_operand.vmem [shape: f32[1,64], index: 2, kind: input, shape index: {}]
  %s3 = inlined_call_operand.vmem [shape: bf16[64,32], index: 3, kind: input, shape index: {}]
  %s4 = inlined_call_operand.vmem [shape: f32[1,32], index: 4, kind: input, shape index: {}]
  %s5 = inlined_call_operand.hbm [shape: bf16[8,32], index: 5, kind: output, shape index: {}]
  %s6 = sld [smem:[#allocation0]]
  $region30: #{tpu_custom_call.1} parent=0
    _
  %s8 = ssub.s32 1, %s6
  %s9 = scalar_select 0, %s8, %s6
  $region1: #{tpu_custom_call.1} parent=0
    #allocation2 [shape = 'u8[2048]{0}', space=vmem, size = 0x800, scoped, tag = 'output window, operand 0, single buffered']
    #allocation3 [shape = 's32[1]{0}', space=sflag, size = 0x4, scoped, tag = 'scoped memory for tpu_custom_call.1']
    %10 = vsyncpa [#allocation3], 0
    // Predicated region
    $region2: #{tpu_custom_call.1} parent=1 // pred_check
      _
    $region3: #{tpu_custom_call.1} parent=1 // pred_check_branch
      %12 = sbr.rel (0) target = $region5
    $region4: #{tpu_custom_call.1} parent=1 // pred_region
      _
    $region5: #{tpu_custom_call.1} parent=1 // pred_fallthru
      _
    // Predicated region
    $region6: #{tpu_custom_call.1} parent=1 // pred_check
      _
    $region7: #{tpu_custom_call.1} parent=1 // pred_check_branch
      %14 = sbr.rel (0) target = $region9
    $region8: #{tpu_custom_call.1} parent=1 // pred_region
      _
    $region9: #{tpu_custom_call.1} parent=1 // pred_fallthru
      _
    // Predicated region
    $region10: #{tpu_custom_call.1} parent=1 // pred_check
      _
    $region11: #{tpu_custom_call.1} parent=1 // pred_check_branch
      %16 = sbr.rel (0) target = $region13
    $region12: #{tpu_custom_call.1} parent=1 // pred_region
      _
    $region13: #{tpu_custom_call.1} parent=1 // pred_fallthru
      _
    // Predicated region
    $region14: #{tpu_custom_call.1} parent=1 // pred_check
      _
    $region15: #{tpu_custom_call.1} parent=1 // pred_check_branch
      %18 = sbr.rel (0) target = $region17
    $region16: #{tpu_custom_call.1} parent=1 // pred_region
      _
    $region17: #{tpu_custom_call.1} parent=1 // pred_fallthru
      _
    // Predicated region
    $region18: #{tpu_custom_call.1} parent=1 // pred_check
      _
    $region19: #{tpu_custom_call.1} parent=1 // pred_check_branch
      %20 = sbr.rel (0) target = $region21
    $region20: #{tpu_custom_call.1} parent=1 // pred_region
      _
    $region21: #{tpu_custom_call.1} parent=1 // pred_fallthru
      _
    %v22 = vld [vmem:[%s0] sm:$0xf]
    %v23 = vld [vmem:[%s1] sm:$0xf]
    %v24 = vld [vmem:[%s1 + $0x4] sm:$0xf]
    %v25 = vld [vmem:[%s1 + $0x8] sm:$0xf]
    %v26 = vld [vmem:[%s1 + $0xc] sm:$0xf]
    %v27 = vld [vmem:[%s2] sm:$0x1]
    %v29 = vlaneseq
    %v30 = vshrl.u32 %v29, 7
    %v31 = vsub.s32 0, %v30
    %v32 = vrot.slane %v27, %v31
    %v38 = vunpack.c.l.b16 %v23
    %v39 = vunpack.c.l.b16 %v24
    %v40 = vunpack.c.l.b16 %v25
    %v41 = vunpack.c.l.b16 %v26
    %v42 = vpack.c.b16 %v39, %v38
    %v43 = vpack.c.b16 %v41, %v40
    %vm46 = vcmask 261120
    %v48 = vsel %vm46, %v22, 0
    %50 = vmatprep.subr.bf16.mxu0 0
    %51 = vmatpush1.bf16.msra.mxu0 %v42
    %52 = vmatprep.subr.bf16.mxu0 0
    %53 = vmatpush1.bf16.msra.mxu0 %v43
    %54 = vmatprep.subr.bf16.mxu0 0
    %55 = vmatpush1.bf16.msra.mxu0 0
    %56 = vmatprep.subr.bf16.mxu0 0
    %57 = vmatpush1.bf16.msra.mxu0 0
    %58 = vmatprep.subr.bf16.mxu0 0
    %59 = vmatpush1.bf16.msra.mxu0 0
    %60 = vmatprep.subr.bf16.mxu0 0
    %61 = vmatpush1.bf16.msra.mxu0 0
    %62 = vmatprep.subr.bf16.mxu0 0
    %63 = vmatpush1.bf16.msra.mxu0 0
    %64 = vmatprep.subr.bf16.mxu0 0
    %65 = vmatpush1.bf16.msra.mxu0 0
    %66 = vmatprep.subr.bf16.mxu0 0
    %67 = vmatpush1.bf16.msra.mxu0 0
    %68 = vmatprep.subr.bf16.mxu0 0
    %69 = vmatpush1.bf16.msra.mxu0 0
    %70 = vmatprep.subr.bf16.mxu0 0
    %71 = vmatpush1.bf16.msra.mxu0 0
    %72 = vmatprep.subr.bf16.mxu0 0
    %73 = vmatpush1.bf16.msra.mxu0 0
    %74 = vmatprep.subr.bf16.mxu0 0
    %75 = vmatpush1.bf16.msra.mxu0 0
    %76 = vmatprep.subr.bf16.mxu0 0
    %77 = vmatpush1.bf16.msra.mxu0 0
    %78 = vmatprep.subr.bf16.mxu0 0
    %79 = vmatpush1.bf16.msra.mxu0 0
    %80 = vmatprep.subr.bf16.mxu0 0
    %81 = vmatpush1.bf16.msra.mxu0 0
    %82 = vmatprep.mubr.bf16.mxu0 0
    %83 = vmatmul.mubr.bf16.gmra.mrb[0].mxu0 %v48
    %v84 = vpop.f32.mrb[0].mxu0
    %v85 = vadd.f32 %v32, %v84
    %v86 = vpop.f32.mrb[0].mxu0
    %v87 = vpop.f32.mrb[0].mxu0
    %v88 = vpop.f32.mrb[0].mxu0
    %89 = vdwg.mxu0
    %v90 = vmax.f32 %v85, 0.0
    %v91 = vpack.c.bf16 %v90, %v90
    %v92 = vld [vmem:[%s3] sm:$0xf]
    %v93 = vld [vmem:[%s3 + $0x4] sm:$0xf]
    %v94 = vld [vmem:[%s3 + $0x8] sm:$0xf]
    %v95 = vld [vmem:[%s3 + $0xc] sm:$0xf]
    %v96 = vld [vmem:[%s3 + $0x10] sm:$0xf]
    %v97 = vld [vmem:[%s3 + $0x14] sm:$0xf]
    %v98 = vld [vmem:[%s3 + $0x18] sm:$0xf]
    %v99 = vld [vmem:[%s3 + $0x1c] sm:$0xf]
    %v100 = vld [vmem:[%s4] sm:$0x1]
    %v102 = vlaneseq
    %v103 = vshrl.u32 %v102, 7
    %v104 = vsub.s32 0, %v103
    %v105 = vrot.slane %v100, %v104
    %v115 = vunpack.c.l.b16 %v92
    %v116 = vunpack.c.l.b16 %v93
    %v117 = vunpack.c.l.b16 %v94
    %v118 = vunpack.c.l.b16 %v95
    %v119 = vunpack.c.l.b16 %v96
    %v120 = vunpack.c.l.b16 %v97
    %v121 = vunpack.c.l.b16 %v98
    %v122 = vunpack.c.l.b16 %v99
    %v123 = vpack.c.b16 %v116, %v115
    %v124 = vpack.c.b16 %v118, %v117
    %v125 = vpack.c.b16 %v120, %v119
    %v126 = vpack.c.b16 %v122, %v121
    %vm131 = vcmask 523264
    %v133 = vsel %vm131, %v91, 0
    %135 = vmatprep.subr.bf16.mxu0 0
    %136 = vmatpush1.bf16.msra.mxu0 %v123
    %137 = vmatprep.subr.bf16.mxu0 0
    %138 = vmatpush1.bf16.msra.mxu0 %v124
    %139 = vmatprep.subr.bf16.mxu0 0
    %140 = vmatpush1.bf16.msra.mxu0 %v125
    %141 = vmatprep.subr.bf16.mxu0 0
    %142 = vmatpush1.bf16.msra.mxu0 %v126
    %143 = vmatprep.subr.bf16.mxu0 0
    %144 = vmatpush1.bf16.msra.mxu0 0
    %145 = vmatprep.subr.bf16.mxu0 0
    %146 = vmatpush1.bf16.msra.mxu0 0
    %147 = vmatprep.subr.bf16.mxu0 0
    %148 = vmatpush1.bf16.msra.mxu0 0
    %149 = vmatprep.subr.bf16.mxu0 0
    %150 = vmatpush1.bf16.msra.mxu0 0
    %151 = vmatprep.subr.bf16.mxu0 0
    %152 = vmatpush1.bf16.msra.mxu0 0
    %153 = vmatprep.subr.bf16.mxu0 0
    %154 = vmatpush1.bf16.msra.mxu0 0
    %155 = vmatprep.subr.bf16.mxu0 0
    %156 = vmatpush1.bf16.msra.mxu0 0
    %157 = vmatprep.subr.bf16.mxu0 0
    %158 = vmatpush1.bf16.msra.mxu0 0
    %159 = vmatprep.subr.bf16.mxu0 0
    %160 = vmatpush1.bf16.msra.mxu0 0
    %161 = vmatprep.subr.bf16.mxu0 0
    %162 = vmatpush1.bf16.msra.mxu0 0
    %163 = vmatprep.subr.bf16.mxu0 0
    %164 = vmatpush1.bf16.msra.mxu0 0
    %165 = vmatprep.subr.bf16.mxu0 0
    %166 = vmatpush1.bf16.msra.mxu0 0
    %167 = vmatprep.mubr.bf16.mxu0 0
    %168 = vmatmul.mubr.bf16.gmra.mrb[0].mxu0 %v133
    %v169 = vpop.f32.mrb[0].mxu0
    %v170 = vadd.f32 %v105, %v169
    %v171 = vpop.f32.mrb[0].mxu0
    %v172 = vpop.f32.mrb[0].mxu0
    %v173 = vpop.f32.mrb[0].mxu0
    %174 = vdwg.mxu0
    %v175 = vpack.c.bf16 %v170, %v170
    %vm176 = vcmask 257024
    %177 = vst.msk [vmem:[#allocation2] sm:$0xf] %vm176, %v175
    // Predicated region
    $region22: #{tpu_custom_call.1} parent=1 // pred_check
      _
    $region23: #{tpu_custom_call.1} parent=1 // pred_check_branch
      %179 = sbr.rel (0) target = $region25
    $region24: #{tpu_custom_call.1} parent=1 // pred_region
      %s181 = ssub.s32 64, 64
      %182 = vsyncadd [#allocation3], %s181
      %s184 = sshll.u32 [#allocation2], 4
      %s185 = int_to_ptr.vmem [resolvable:$true] %s184
      %187 = dma.vmem_to_hbm [thread:$0]  %s185, 64, %s5, [#allocation3]
    $region25: #{tpu_custom_call.1} parent=1 // pred_fallthru
      _
    // Predicated region
    $region26: #{tpu_custom_call.1} parent=1 // pred_check
      _
    $region27: #{tpu_custom_call.1} parent=1 // pred_check_branch
      %189 = sbr.rel (0) target = $region29
    $region28: #{tpu_custom_call.1} parent=1 // pred_region
      %190 = dma.done [#allocation3], 64
    $region29: #{tpu_custom_call.1} parent=1 // pred_fallthru
      _
    %191 = vsyncpa [#allocation3], 1

</llo_original>
